<compile_context>
chip_gen: v6e
topology: v6e:2x2x1
jax: 0.10.0
libtpu: 0.0.40
codegen_flags: <defaults>
</compile_context>

<pallas_src>
import functools

import jax
import jax.numpy as jnp
from jax import lax
from jax.experimental import pallas as pl
from jax.experimental.pallas import tpu as pltpu


def _tpu_hw():
    """Best-effort (VMEM bytes per core, TensorCores per chip) query."""
    vmem_cap = 64 * 1024 * 1024            # conservative default (v7x per-TC)
    num_cores = 1
    try:
        info = pltpu.get_tpu_info()
        cap = getattr(info, "vmem_capacity_bytes", None)
        if cap:
            vmem_cap = int(cap)
        for attr in ("num_cores", "core_count", "tensorcore_count"):
            c = getattr(info, attr, None)
            if c and int(c) > 0:
                num_cores = int(c)
                break
    except Exception:
        pass
    if num_cores == 1:
        try:
            kind = jax.devices()[0].device_kind.lower()
            # Megacore / multi-TensorCore-per-chip generations.
            if ("v4" in kind) or ("v5p" in kind) or ("v7" in kind):
                num_cores = 2
        except Exception:
            pass
    return vmem_cap, max(1, min(num_cores, 2))


def _tv_kernel(x_ref, out_h_ref, out_w_ref, *, img_w, total_rows, block_rows,
               s_steps, mask_rows):
    p = pl.program_id(0)      # parallel axis (per-core partial sums)
    s = pl.program_id(1)      # arbitrary axis (row tiles)

    @pl.when(s == 0)
    def _init():
        out_h_ref[...] = jnp.zeros_like(out_h_ref)
        out_w_ref[...] = jnp.zeros_like(out_w_ref)

    x = x_ref[...].astype(jnp.float32)            # (block_rows, L), lane-dense

    if mask_rows:
        # Zero rows beyond the real B*C row count (tail / clamped duplicate
        # tiles).  A (block_rows, 1) iota broadcast in the select keeps this
        # to ~1 VPU op per vreg; jnp.where (not multiply) so NaN/Inf padding
        # garbage cannot leak into the sums.
        row_start = (p * s_steps + s) * block_rows
        row_idx = lax.broadcasted_iota(jnp.int32, (block_rows, 1), 0) + row_start
        x = jnp.where(row_idx < total_rows, x, 0.0)

    # Finite differences via XLU rolls.  Wrap lanes (i % W == 0 for dw,
    # i < W for dh) carry invalid pairs that are masked out in the wrapper:
    # the masks depend only on the lane index, which the per-lane accumulators
    # preserve, so the hot loop stays VPU-only.
    dw = x - pltpu.roll(x, shift=1, axis=1)
    dh = x - pltpu.roll(x, shift=img_w, axis=1)
    dh2 = dh * dh
    dw2 = dw * dw

    acc_rows, lanes = out_h_ref.shape
    if acc_rows > 1 and block_rows % acc_rows == 0:
        g = block_rows // acc_rows
        if g > 1:
            # Fold groups of `acc_rows` sublanes with pure vreg adds; no
            # cross-sublane XLU reduce in the inner loop.
            dh2 = dh2.reshape(g, acc_rows, lanes).sum(axis=0)
            dw2 = dw2.reshape(g, acc_rows, lanes).sum(axis=0)
        out_h_ref[...] += dh2
        out_w_ref[...] += dw2
    else:
        out_h_ref[...] += jnp.sum(dh2, axis=0, keepdims=True)
        out_w_ref[...] += jnp.sum(dw2, axis=0, keepdims=True)


def _tv_loss_jax(x, tv_loss_weight=1.0):
    # Pure-JAX formula: used as reference and as the small/huge-input fallback.
    B, C, H, W = x.shape
    xf = x.astype(jnp.float32)
    h_tv = jnp.sum((xf[:, :, 1:, :] - xf[:, :, :-1, :]) ** 2)
    w_tv = jnp.sum((xf[:, :, :, 1:] - xf[:, :, :, :-1]) ** 2)
    count_h = C * (H - 1) * W
    count_w = C * H * (W - 1)
    return tv_loss_weight * 2.0 * (h_tv / count_h + w_tv / count_w) / B


def tv_loss(x, tv_loss_weight=1.0, use_pallas=None):
    B, C, H, W = x.shape
    R = B * C            # independent rows (one per (b, c) plane)
    L = H * W            # flattened, lane-dense image axis

    # Tiny inputs: a single-step pallas_call is dominated by launch overhead;
    # let XLA fuse the trivial formula instead (use_pallas=True overrides).
    if use_pallas is None:
        use_pallas = R * L * jnp.dtype(x.dtype).itemsize >= (512 * 1024)
    if not use_pallas:
        return _tv_loss_jax(x, tv_loss_weight)

    vmem_cap, num_cores = _tpu_hw()

    itemsize = jnp.dtype(x.dtype).itemsize
    row_native = L * itemsize
    row_f32 = L * 4

    # Deferred-sublane accumulators are (acc_rows, L) f32 x 2 outputs (x2 for
    # buffering).  Drop to a 1-row accumulator when L is so large that 8-row
    # accumulators would eat the block budget.
    acc_rows_pref = 8 if (2 * 2 * 8 * row_f32) <= vmem_cap // 16 else 1
    fixed_bytes = 2 * 2 * acc_rows_pref * row_f32

    # Per-generation block budget: double-buffered native-dtype input block
    # plus ~4 live f32-block-sized temps (cast x, dh/dw, dh2/dw2), kept inside
    # ~3/8 of physical VMEM (~24 MiB on v7x's 64 MiB, ~48 MiB on v5e/v6e).
    cost_per_row = 2 * row_native + 4 * row_f32
    budget = (3 * vmem_cap) // 8 - fixed_bytes

    if R <= 8:
        block_rows = R                   # block == full dim (allowed)
        acc_rows = R
    else:
        rows_fit = budget // cost_per_row if budget > 0 else 0
        if rows_fit < 8:
            # TODO(synk): add lane-axis (H*W) tiling with a 1-row (W-element)
            # halo for planes too large for an 8-row block; fall back to XLA.
            return _tv_loss_jax(x, tv_loss_weight)
        block_rows = max(8, (min(int(rows_fit), R) // 8) * 8)
        acc_rows = acc_rows_pref

    num_tiles = pl.cdiv(R, block_rows)

    # One partial-sum slice per TensorCore; P=1 on single-core chips so no
    # duplicate clamped tile is ever DMA'd / computed.
    P = num_cores if (num_cores > 1 and num_tiles >= num_cores) else 1
    if P > 1 and num_tiles % P != 0:
        # Prefer a block size whose tile count splits evenly across cores
        # (avoids a wasted, fully-masked duplicate tile on one core).
        floor_br = max(8, ((block_rows // 2) // 8) * 8)
        br = block_rows
        while br > floor_br and pl.cdiv(R, br) % P != 0:
            br -= 8
        if pl.cdiv(R, br) % P == 0:
            block_rows = br
            num_tiles = pl.cdiv(R, br)

    S = pl.cdiv(num_tiles, P)
    mask_rows = (num_tiles * block_rows != R) or (P * S != num_tiles)
    need_clamp = (P * S != num_tiles)

    x2 = x.reshape(R, L)                 # contiguous reshape: no data movement

    kernel = functools.partial(
        _tv_kernel, img_w=W, total_rows=R, block_rows=block_rows,
        s_steps=S, mask_rows=mask_rows)

    def x_index_map(p, s):
        t = p * S + s
        if need_clamp:
            # Over-provisioned steps re-read the last valid tile; their rows
            # are zeroed by the in-kernel row mask.
            t = jnp.minimum(t, num_tiles - 1)
        return (t, 0)

    out_h, out_w = pl.pallas_call(
        kernel,
        out_shape=(
            jax.ShapeDtypeStruct((P, acc_rows, L), jnp.float32),
            jax.ShapeDtypeStruct((P, acc_rows, L), jnp.float32),
        ),
        grid_spec=pltpu.PrefetchScalarGridSpec(
            num_scalar_prefetch=0,
            grid=(P, S),
            in_specs=[pl.BlockSpec((block_rows, L), x_index_map)],
            out_specs=[
                pl.BlockSpec((None, acc_rows, L), lambda p, s: (p, 0, 0)),
                pl.BlockSpec((None, acc_rows, L), lambda p, s: (p, 0, 0)),
            ],
        ),
        compiler_params=pltpu.CompilerParams(
            dimension_semantics=("parallel", "arbitrary"),
            vmem_limit_bytes=min((3 * vmem_cap) // 4, 64 * 1024 * 1024),
        ),
    )(x2)

    # Final (tiny) masked cross-lane / cross-core reduction + normalization in
    # XLA.  The lane-validity masks were deferred out of the hot loop: per-lane
    # partial sums preserve the flattened image index i = h*W + w.
    lane = jnp.arange(L, dtype=jnp.int32)
    mask_h = (lane >= W).astype(jnp.float32)       # valid H-direction pairs
    mask_w = (lane % W != 0).astype(jnp.float32)   # valid W-direction pairs
    h_tv = jnp.sum(out_h * mask_h)
    w_tv = jnp.sum(out_w * mask_w)

    count_h = C * (H - 1) * W
    count_w = C * H * (W - 1)
    return tv_loss_weight * 2.0 * (h_tv / count_h + w_tv / count_w) / B


if __name__ == "__main__":
    key = jax.random.PRNGKey(0)

    # Small shape matching the module's intended NCHW input.
    B, C, H, W = 2, 4, 16, 16
    x = jax.random.normal(key, (B, C, H, W), dtype=jnp.float32)
    out = jax.block_until_ready(tv_loss(x, tv_loss_weight=1.0, use_pallas=True))
    ref = _tv_loss_ref = _tv_loss_jax(x, tv_loss_weight=1.0)
    assert jnp.allclose(out, ref, rtol=1e-4, atol=1e-5), (out, ref)

    # Second check exercising the tail-row masking path (B*C = 15 is not a
    # multiple of the 8-row block granule) and a non-power-of-two W.
    x2 = jax.random.normal(jax.random.PRNGKey(0), (3, 5, 24, 20),
                           dtype=jnp.float32)
    out2 = jax.block_until_ready(tv_loss(x2, tv_loss_weight=0.5,
                                         use_pallas=True))
    ref2 = _tv_loss_jax(x2, tv_loss_weight=0.5)
    assert jnp.allclose(out2, ref2, rtol=1e-4, atol=1e-5), (out2, ref2)

    print("KERNEL_OK")
</pallas_src>

<mosaic_0001>
module attributes {stable_mosaic.version = 11 : i64} {
  func.func @_tv_kernel(%arg0: i32, %arg1: i32, %arg2: memref<8x256xf32, #tpu.memory_space<vmem>>, %arg3: memref<1x8x256xf32, #tpu.memory_space<vmem>>, %arg4: memref<1x8x256xf32, #tpu.memory_space<vmem>>) attributes {dimension_semantics = [#tpu.dimension_semantics<parallel>, #tpu.dimension_semantics<arbitrary>], iteration_bounds = array<i64: 1, 1>, scalar_prefetch = 0 : i64, scratch_operands = 0 : i64, tpu.core_type = #tpu.core_type<tc>, window_params = [{transform_indices = @transform_0, window_bounds = array<i64: 8, 256>}, {transform_indices = @transform_1, window_bounds = array<i64: 1, 8, 256>}, {transform_indices = @transform_2, window_bounds = array<i64: 1, 8, 256>}]} {
    %c0_i32 = arith.constant 0 : i32
    %0 = arith.cmpi eq, %arg1, %c0_i32 : i32
    %1 = arith.extui %0 : i1 to i32
    %c0_i32_0 = arith.constant 0 : i32
    %2 = arith.cmpi ne, %1, %c0_i32_0 : i32
    scf.if %2 {
      %cst = arith.constant 0.000000e+00 : f32
      %22 = vector.broadcast %cst : f32 to vector<8x256xf32>
      %c0_14 = arith.constant 0 : index
      %c0_15 = arith.constant 0 : index
      %c0_16 = arith.constant 0 : index
      %23 = vector.load %arg3[%c0_14, %c0_15, %c0_16] : memref<1x8x256xf32, #tpu.memory_space<vmem>>, vector<1x8x256xf32>
      %24 = vector.shape_cast %23 : vector<1x8x256xf32> to vector<8x256xf32>
      %25 = vector.shape_cast %22 : vector<8x256xf32> to vector<1x8x256xf32>
      tpu.vector_store %arg3[%c0_14, %c0_15, %c0_16], %25 {strides = array<i32>} : memref<1x8x256xf32, #tpu.memory_space<vmem>>, vector<1x8x256xf32>,
      %cst_17 = arith.constant 0.000000e+00 : f32
      %26 = vector.broadcast %cst_17 : f32 to vector<8x256xf32>
      %c0_18 = arith.constant 0 : index
      %c0_19 = arith.constant 0 : index
      %c0_20 = arith.constant 0 : index
      %27 = vector.load %arg4[%c0_18, %c0_19, %c0_20] : memref<1x8x256xf32, #tpu.memory_space<vmem>>, vector<1x8x256xf32>
      %28 = vector.shape_cast %27 : vector<1x8x256xf32> to vector<8x256xf32>
      %29 = vector.shape_cast %26 : vector<8x256xf32> to vector<1x8x256xf32>
      tpu.vector_store %arg4[%c0_18, %c0_19, %c0_20], %29 {strides = array<i32>} : memref<1x8x256xf32, #tpu.memory_space<vmem>>, vector<1x8x256xf32>,
    } else {
    }
    %c0 = arith.constant 0 : index
    %c0_1 = arith.constant 0 : index
    %3 = vector.load %arg2[%c0, %c0_1] : memref<8x256xf32, #tpu.memory_space<vmem>>, vector<8x256xf32>
    %c1_i32 = arith.constant 1 : i32
    %4 = tpu.dynamic_rotate %3 by %c1_i32 dim 1 : vector<8x256xf32>, i32 -> vector<8x256xf32>
    %5 = arith.subf %3, %4 : vector<8x256xf32>
    %c16_i32 = arith.constant 16 : i32
    %6 = tpu.dynamic_rotate %3 by %c16_i32 dim 1 : vector<8x256xf32>, i32 -> vector<8x256xf32>
    %7 = arith.subf %3, %6 : vector<8x256xf32>
    %8 = arith.mulf %7, %7 : vector<8x256xf32>
    %9 = arith.mulf %5, %5 : vector<8x256xf32>
    %c0_2 = arith.constant 0 : index
    %c0_3 = arith.constant 0 : index
    %c0_4 = arith.constant 0 : index
    %10 = vector.load %arg3[%c0_2, %c0_3, %c0_4] : memref<1x8x256xf32, #tpu.memory_space<vmem>>, vector<1x8x256xf32>
    %11 = vector.shape_cast %10 : vector<1x8x256xf32> to vector<8x256xf32>
    %12 = arith.addf %11, %8 : vector<8x256xf32>
    %c0_5 = arith.constant 0 : index
    %c0_6 = arith.constant 0 : index
    %c0_7 = arith.constant 0 : index
    %13 = vector.load %arg3[%c0_5, %c0_6, %c0_7] : memref<1x8x256xf32, #tpu.memory_space<vmem>>, vector<1x8x256xf32>
    %14 = vector.shape_cast %13 : vector<1x8x256xf32> to vector<8x256xf32>
    %15 = vector.shape_cast %12 : vector<8x256xf32> to vector<1x8x256xf32>
    tpu.vector_store %arg3[%c0_5, %c0_6, %c0_7], %15 {strides = array<i32>} : memref<1x8x256xf32, #tpu.memory_space<vmem>>, vector<1x8x256xf32>,
    %c0_8 = arith.constant 0 : index
    %c0_9 = arith.constant 0 : index
    %c0_10 = arith.constant 0 : index
    %16 = vector.load %arg4[%c0_8, %c0_9, %c0_10] : memref<1x8x256xf32, #tpu.memory_space<vmem>>, vector<1x8x256xf32>
    %17 = vector.shape_cast %16 : vector<1x8x256xf32> to vector<8x256xf32>
    %18 = arith.addf %17, %9 : vector<8x256xf32>
    %c0_11 = arith.constant 0 : index
    %c0_12 = arith.constant 0 : index
    %c0_13 = arith.constant 0 : index
    %19 = vector.load %arg4[%c0_11, %c0_12, %c0_13] : memref<1x8x256xf32, #tpu.memory_space<vmem>>, vector<1x8x256xf32>
    %20 = vector.shape_cast %19 : vector<1x8x256xf32> to vector<8x256xf32>
    %21 = vector.shape_cast %18 : vector<8x256xf32> to vector<1x8x256xf32>
    tpu.vector_store %arg4[%c0_11, %c0_12, %c0_13], %21 {strides = array<i32>} : memref<1x8x256xf32, #tpu.memory_space<vmem>>, vector<1x8x256xf32>,
    return
  }
  func.func @transform_0(%arg0: i32, %arg1: i32) -> (i32, i32) {
    %c1_i32 = arith.constant 1 : i32
    %0 = arith.muli %arg0, %c1_i32 : i32
    %1 = arith.addi %0, %arg1 : i32
    %c0_i32 = arith.constant 0 : i32
    %c0_i32_0 = arith.constant 0 : i32
    return %1, %c0_i32 : i32, i32
  }
  func.func @transform_1(%arg0: i32, %arg1: i32) -> (i32, i32, i32) {
    %c0_i32 = arith.constant 0 : i32
    %c0_i32_0 = arith.constant 0 : i32
    %c0_i32_1 = arith.constant 0 : i32
    return %arg0, %c0_i32, %c0_i32_0 : i32, i32, i32
  }
  func.func @transform_2(%arg0: i32, %arg1: i32) -> (i32, i32, i32) {
    %c0_i32 = arith.constant 0 : i32
    %c0_i32_0 = arith.constant 0 : i32
    %c0_i32_1 = arith.constant 0 : i32
    return %arg0, %c0_i32, %c0_i32_0 : i32, i32, i32
  }
}

</mosaic_0001>

<llo_original>
// kernel: tpu_custom_call.1
$region0: #{tpu_custom_call.1}
  #allocation0 [shape = 'u32[]', space=smem, size = 0x4, offset = 0x4, fixed_abs, tag = 'smem constant byte address 0x4 - core index']
  #allocation1 [shape = 'u32[144,128]{1,0:T(1,128)}', space=vmem, size = 0x12000, scoped, tag = 'internal scratch']
  %s0 = inlined_call_operand.hbm [shape: f32[8,256], index: 0, kind: input, shape index: {}]
  %s1 = inlined_call_operand.hbm [shape: f32[1,8,256], index: 1, kind: output, shape index: {0}]
  %s2 = inlined_call_operand.hbm [shape: f32[1,8,256], index: 2, kind: output, shape index: {1}]
  %3 = xla_tuple %s1, %s2
  %s4 = sld [smem:[#allocation0]]
  $region30: #{tpu_custom_call.1} parent=0
    _
  %s6 = ssub.s32 1, %s4
  %s7 = scalar_select 0, %s6, %s4
  $region1: #{tpu_custom_call.1} parent=0
    #allocation2 [shape = 'u8[8192]{0}', space=vmem, size = 0x2000, scoped, tag = 'input window, operand 0, single buffered']
    #allocation3 [shape = 's32[1]{0}', space=sflag, size = 0x4, scoped, tag = 'scoped memory for tpu_custom_call.1']
    #allocation4 [shape = 's32[1]{0}', space=sflag, size = 0x4, scoped, tag = 'scoped memory for tpu_custom_call.1']
    #allocation5 [shape = 'u8[8192]{0}', space=vmem, size = 0x2000, scoped, tag = 'output window, operand 0, single buffered']
    #allocation6 [shape = 'u8[8192]{0}', space=vmem, size = 0x2000, scoped, tag = 'output window, operand 1, single buffered']
    #allocation7 [shape = 's32[1]{0}', space=sflag, size = 0x4, scoped, tag = 'scoped memory for tpu_custom_call.1']
    %8 = vsyncpa [#allocation3], 0
    %9 = vsyncpa [#allocation4], 0
    %10 = vsyncpa [#allocation7], 0
    // Predicated region
    $region2: #{tpu_custom_call.1} parent=1 // pred_check
      _
    $region3: #{tpu_custom_call.1} parent=1 // pred_check_branch
      %12 = sbr.rel (0) target = $region5
    $region4: #{tpu_custom_call.1} parent=1 // pred_region
      %s13 = sadd.s32 0, 0
      %s15 = ssub.s32 256, 256
      %16 = vsyncadd [#allocation3], %s15
      %s17 = smul.addr %s13, 2
      %s18 = smul.addr %s17, 128
      %s19 = scalar_lea.hbm %s0, %s18
      %s21 = sshll.u32 [#allocation2], 4
      %s22 = int_to_ptr.vmem [resolvable:$true] %s21
      %24 = dma.hbm_to_vmem [thread:$0]  %s19, 256, %s22, [#allocation3]
    $region5: #{tpu_custom_call.1} parent=1 // pred_fallthru
      _
    // Predicated region
    $region6: #{tpu_custom_call.1} parent=1 // pred_check
      _
    $region7: #{tpu_custom_call.1} parent=1 // pred_check_branch
      %26 = sbr.rel (0) target = $region9
    $region8: #{tpu_custom_call.1} parent=1 // pred_region
      %27 = dma.done [#allocation3], 256
    $region9: #{tpu_custom_call.1} parent=1 // pred_fallthru
      _
    %s28 = sadd.s32 0, 0
    %p29 = scmp.eq.s32.totalorder 0, 0
    // Predicated region
    $region10: #{tpu_custom_call.1} parent=1 // pred_check
      %p30 = pneg %p29
    $region11: #{tpu_custom_call.1} parent=1 // pred_check_branch
      %32 = sbr.rel (%p30) target = $region13
    $region12: #{tpu_custom_call.1} parent=1 // pred_region
      %33 = vst [vmem:[#allocation5] sm:$0xff] 0.0
      %34 = vst [vmem:[#allocation5 + $0x8] sm:$0xff] 0.0
      %35 = vst [vmem:[#allocation6] sm:$0xff] 0.0
      %36 = vst [vmem:[#allocation6 + $0x8] sm:$0xff] 0.0
    $region13: #{tpu_custom_call.1} parent=1 // pred_fallthru
      _
    %v37 = vld [vmem:[#allocation2] sm:$0xff]
    %v38 = vld [vmem:[#allocation2 + $0x8] sm:$0xff]
    %39 = vrot.lane.b32.xlu0 %v37, 1
    %v40 = vpop.permute.xlu0 %39
    %41 = vrot.lane.b32.xlu0 %v38, 1
    %v42 = vpop.permute.xlu0 %41
    %v43 = vlaneseq
    %v44 = vand.u32 %v43, 127
    %vm45 = vcmp.lt.s32.totalorder %v44, 1
    %v46 = vsel %vm45, %v40, %v42
    %v47 = vsel %vm45, %v42, %v40
    %v48 = vsub.f32 %v37, %v47
    %v49 = vsub.f32 %v38, %v46
    %50 = vrot.lane.b32.xlu0 %v37, 16
    %v51 = vpop.permute.xlu0 %50
    %52 = vrot.lane.b32.xlu0 %v38, 16
    %v53 = vpop.permute.xlu0 %52
    %vm54 = vcmp.lt.s32.totalorder %v44, 16
    %v55 = vsel %vm54, %v51, %v53
    %v56 = vsel %vm54, %v53, %v51
    %v57 = vsub.f32 %v37, %v56
    %v58 = vsub.f32 %v38, %v55
    %v59 = vmul.f32 %v57, %v57
    %v60 = vmul.f32 %v58, %v58
    %v61 = vmul.f32 %v48, %v48
    %v62 = vmul.f32 %v49, %v49
    %v63 = vld [vmem:[#allocation5] sm:$0xff]
    %v64 = vld [vmem:[#allocation5 + $0x8] sm:$0xff]
    %v65 = vadd.f32 %v63, %v59
    %v66 = vadd.f32 %v64, %v60
    %67 = vst [vmem:[#allocation5] sm:$0xff] %v65
    %68 = vst [vmem:[#allocation5 + $0x8] sm:$0xff] %v66
    %v69 = vld [vmem:[#allocation6] sm:$0xff]
    %v70 = vld [vmem:[#allocation6 + $0x8] sm:$0xff]
    %v71 = vadd.f32 %v69, %v61
    %v72 = vadd.f32 %v70, %v62
    %73 = vst [vmem:[#allocation6] sm:$0xff] %v71
    %74 = vst [vmem:[#allocation6 + $0x8] sm:$0xff] %v72
    // Predicated region
    $region14: #{tpu_custom_call.1} parent=1 // pred_check
      _
    $region15: #{tpu_custom_call.1} parent=1 // pred_check_branch
      %76 = sbr.rel (0) target = $region17
    $region16: #{tpu_custom_call.1} parent=1 // pred_region
      %s78 = ssub.s32 256, 256
      %79 = vsyncadd [#allocation4], %s78
      %s81 = sshll.u32 [#allocation5], 4
      %s82 = int_to_ptr.vmem [resolvable:$true] %s81
      %84 = dma.vmem_to_hbm [thread:$0]  %s82, 256, %s1, [#allocation4]
    $region17: #{tpu_custom_call.1} parent=1 // pred_fallthru
      _
    // Predicated region
    $region18: #{tpu_custom_call.1} parent=1 // pred_check
      _
    $region19: #{tpu_custom_call.1} parent=1 // pred_check_branch
      %86 = sbr.rel (0) target = $region21
    $region20: #{tpu_custom_call.1} parent=1 // pred_region
      %s88 = ssub.s32 256, 256
      %89 = vsyncadd [#allocation7], %s88
      %s91 = sshll.u32 [#allocation6], 4
      %s92 = int_to_ptr.vmem [resolvable:$true] %s91
      %94 = dma.vmem_to_hbm [thread:$0]  %s92, 256, %s2, [#allocation7]
    $region21: #{tpu_custom_call.1} parent=1 // pred_fallthru
      _
    // Predicated region
    $region22: #{tpu_custom_call.1} parent=1 // pred_check
      _
    $region23: #{tpu_custom_call.1} parent=1 // pred_check_branch
      %96 = sbr.rel (0) target = $region25
    $region24: #{tpu_custom_call.1} parent=1 // pred_region
      %97 = dma.done [#allocation4], 256
    $region25: #{tpu_custom_call.1} parent=1 // pred_fallthru
      _
    // Predicated region
    $region26: #{tpu_custom_call.1} parent=1 // pred_check
      _
    $region27: #{tpu_custom_call.1} parent=1 // pred_check_branch
      %99 = sbr.rel (0) target = $region29
    $region28: #{tpu_custom_call.1} parent=1 // pred_region
      %100 = dma.done [#allocation7], 256
    $region29: #{tpu_custom_call.1} parent=1 // pred_fallthru
      _
    %101 = vsyncpa [#allocation3], 1
    %102 = vsyncpa [#allocation4], 1
    %103 = vsyncpa [#allocation7], 1

</llo_original>
